<compile_context>
chip_gen: v5e
topology: v5e:2x2
jax: 0.10.0
libtpu: 0.0.40
codegen_flags: <defaults>
</compile_context>

<pallas_src>
import jax
import jax.numpy as jnp
from jax.experimental import pallas as pl
from jax.experimental.pallas import tpu as pltpu

IN_DIM = 2
HIDDEN = 5
OUT_DIM = 4
N_EXPERTS = 7

EH = N_EXPERTS * HIDDEN          # 35 : flattened expert-hidden width, (h, e) order
TOT1 = HIDDEN + EH               # 40 : gate-hidden + expert-hidden (fused layer 1)

# Packed parameter slab layout (f32, 64 rows x 128 lanes):
R_W1 = 0                          # rows 0..1   : [wg1 | we1_flat]   (IN_DIM, TOT1)
R_B1 = IN_DIM                     # row  2      : [bg1 | be1_flat]   (1, TOT1)
R_WG2 = 3                         # rows 3..7   : wg2                (HIDDEN, E)
R_BG2 = 8                         # row  8      : bg2                (1, E)
R_WE2 = 16                        # rows 16..50 : we2_flat           (EH, OUT_DIM)
R_BE2 = R_WE2 + EH                # rows 51..57 : be2                (E, OUT_DIM)  (contiguous after we2)
SLAB_ROWS = 64
SLAB_LANES = 128

BATCH_BLOCK = 4096                # batch tile for large B (multiple of 8)


def moe_kernel(x_ref, p_ref, gated_ref, gate_ref):
    x = x_ref[...]                                   # (TB, IN_DIM)
    tb = x.shape[0]

    # ---- layer 1 (gate hidden + all expert hiddens, fused): K=2 VPU FMAs ----
    acc = jnp.broadcast_to(p_ref[R_B1:R_B1 + 1, 0:TOT1], (tb, TOT1))
    for i in range(IN_DIM):                          # static unroll (IN_DIM = 2)
        acc = acc + x[:, i:i + 1] * p_ref[R_W1 + i:R_W1 + i + 1, 0:TOT1]
    h_all = jnp.tanh(acc)                            # single EUP pass (TB, TOT1)

    hg = h_all[:, 0:HIDDEN]                          # (TB, HIDDEN)  gate hidden
    he = h_all[:, HIDDEN:TOT1]                       # (TB, EH)      expert hidden

    # ---- gating logits on the VPU (K=5 broadcast-FMAs, no MXU) + softmax ----
    logits = jnp.broadcast_to(p_ref[R_BG2:R_BG2 + 1, 0:N_EXPERTS], (tb, N_EXPERTS))
    for i in range(HIDDEN):                          # static unroll (HIDDEN = 5)
        logits = logits + hg[:, i:i + 1] * p_ref[R_WG2 + i:R_WG2 + i + 1, 0:N_EXPERTS]
    m = jnp.max(logits, axis=-1, keepdims=True)
    ex = jnp.exp(logits - m)
    gate = ex * pl.reciprocal(jnp.sum(ex, axis=-1, keepdims=True), approx=False)

    # ---- expert layer 2 with gate AND be2 folded in: ONE (TB,42)@(42,4) matmul ----
    # he columns are (h major, e minor) -> gate replication is a lane tile.
    gate_rep = jnp.concatenate([gate] * HIDDEN, axis=1)          # (TB, EH)
    lhs = jnp.concatenate([he * gate_rep, gate], axis=1)         # (TB, EH + E) = (TB, 42)
    gated = jnp.dot(lhs, p_ref[R_WE2:R_WE2 + EH + N_EXPERTS, 0:OUT_DIM],
                    preferred_element_type=jnp.float32)          # (TB, OUT_DIM)

    # ---- two narrow stores (no 128-lane zero padding) ----
    gated_ref[...] = gated
    gate_ref[...] = gate


def pack_params(params):
    """Flatten + pack all gate/expert parameters into one (64, 128) f32 slab."""
    (wg1, bg1, wg2, bg2, we1, be1, we2, be2) = params
    we1_flat = jnp.transpose(we1, (1, 2, 0)).reshape(IN_DIM, EH)     # 'eih' -> 'i,(h e)'
    be1_flat = be1.T.reshape(1, EH)                                  # (h, e) order
    we2_flat = jnp.transpose(we2, (1, 0, 2)).reshape(EH, OUT_DIM)    # 'eho' -> '(h e),o'

    slab = jnp.zeros((SLAB_ROWS, SLAB_LANES), jnp.float32)
    slab = slab.at[R_W1:R_W1 + IN_DIM, 0:TOT1].set(
        jnp.concatenate([wg1, we1_flat], axis=1))
    slab = slab.at[R_B1:R_B1 + 1, 0:TOT1].set(
        jnp.concatenate([bg1, be1_flat], axis=1))
    slab = slab.at[R_WG2:R_WG2 + HIDDEN, 0:N_EXPERTS].set(wg2)
    slab = slab.at[R_BG2:R_BG2 + 1, 0:N_EXPERTS].set(bg2)
    slab = slab.at[R_WE2:R_WE2 + EH, 0:OUT_DIM].set(we2_flat)
    slab = slab.at[R_BE2:R_BE2 + N_EXPERTS, 0:OUT_DIM].set(be2)
    return slab


def _round_up(n, m):
    return ((n + m - 1) // m) * m


def moe_forward(x, packed_slab):
    B = x.shape[0]

    # Batch tiling: single block for tiny B; otherwise split into >=2 blocks
    # (so v7x's two TensorCores both get work via the "parallel" grid axis),
    # capped at BATCH_BLOCK rows.  Pad B up to a tile multiple; padded rows
    # compute garbage that is sliced off (cheap: outputs are only 4 / 7 lanes).
    if B <= 16:
        tb = B
    else:
        tb = min(BATCH_BLOCK, _round_up(pl.cdiv(B, 2), 8))
    B_pad = _round_up(B, tb)
    if B_pad != B:
        x = jnp.pad(x, ((0, B_pad - B), (0, 0)))
    grid = (B_pad // tb,)

    flops = B_pad * (2 * IN_DIM * TOT1 + 2 * HIDDEN * N_EXPERTS
                     + 2 * (EH + N_EXPERTS) * OUT_DIM + 4 * N_EXPERTS)
    transcendentals = B_pad * (TOT1 + N_EXPERTS)
    bytes_accessed = (B_pad * (IN_DIM + OUT_DIM + N_EXPERTS) * 4
                      + SLAB_ROWS * SLAB_LANES * 4)

    gated_out, gate_weights = pl.pallas_call(
        moe_kernel,
        out_shape=(jax.ShapeDtypeStruct((B_pad, OUT_DIM), jnp.float32),
                   jax.ShapeDtypeStruct((B_pad, N_EXPERTS), jnp.float32)),
        grid_spec=pltpu.PrefetchScalarGridSpec(
            num_scalar_prefetch=0,
            grid=grid,
            in_specs=[
                pl.BlockSpec((tb, IN_DIM), lambda i: (i, 0)),
                pl.BlockSpec((SLAB_ROWS, SLAB_LANES), lambda i: (0, 0)),
            ],
            out_specs=[
                pl.BlockSpec((tb, OUT_DIM), lambda i: (i, 0)),
                pl.BlockSpec((tb, N_EXPERTS), lambda i: (i, 0)),
            ],
        ),
        compiler_params=pltpu.CompilerParams(
            dimension_semantics=("parallel",)),
        cost_estimate=pl.CostEstimate(flops=flops,
                                      transcendentals=transcendentals,
                                      bytes_accessed=bytes_accessed),
    )(x, packed_slab)

    if B_pad != B:
        gated_out = gated_out[:B]
        gate_weights = gate_weights[:B]
    return gated_out, gate_weights


def init_params(key):
    ks = jax.random.split(key, 8)
    wg1 = jax.random.normal(ks[0], (IN_DIM, HIDDEN), jnp.float32) * 0.5
    bg1 = jax.random.normal(ks[1], (1, HIDDEN), jnp.float32) * 0.1
    wg2 = jax.random.normal(ks[2], (HIDDEN, N_EXPERTS), jnp.float32) * 0.5
    bg2 = jax.random.normal(ks[3], (1, N_EXPERTS), jnp.float32) * 0.1
    we1 = jax.random.normal(ks[4], (N_EXPERTS, IN_DIM, HIDDEN), jnp.float32) * 0.5
    be1 = jax.random.normal(ks[5], (N_EXPERTS, HIDDEN), jnp.float32) * 0.1
    we2 = jax.random.normal(ks[6], (N_EXPERTS, HIDDEN, OUT_DIM), jnp.float32) * 0.5
    be2 = jax.random.normal(ks[7], (N_EXPERTS, OUT_DIM), jnp.float32) * 0.1
    return (wg1, bg1, wg2, bg2, we1, be1, we2, be2)


def moe_reference(x, params):
    # pure-JAX reference mirroring the PyTorch forward
    (wg1, bg1, wg2, bg2, we1, be1, we2, be2) = params
    hg = jnp.tanh(x @ wg1 + bg1)
    gate = jax.nn.softmax(hg @ wg2 + bg2, axis=-1)
    h = jnp.tanh(jnp.einsum('bi,eih->beh', x, we1) + be1[None])
    eo = jnp.einsum('beh,eho->beo', h, we2) + be2[None]
    gated = jnp.sum(gate[:, :, None] * eo, axis=1)
    return gated, gate


if __name__ == "__main__":
    key = jax.random.PRNGKey(0)
    pkey, xkey, xkey2 = jax.random.split(key, 3)
    params = init_params(pkey)
    slab = pack_params(params)

    # small single-block case
    B = 8
    x = jax.random.normal(xkey, (B, IN_DIM), jnp.float32)
    gated_out, gate_weights = moe_forward(x, slab)
    jax.block_until_ready((gated_out, gate_weights))
    ref_out, ref_gate = moe_reference(x, params)
    assert jnp.allclose(gated_out, ref_out, atol=1e-5, rtol=1e-5)
    assert jnp.allclose(gate_weights, ref_gate, atol=1e-5, rtol=1e-5)

    # multi-block (padded grid) case to exercise the tiled path
    B2 = 40
    x2 = jax.random.normal(xkey2, (B2, IN_DIM), jnp.float32)
    gated_out2, gate_weights2 = moe_forward(x2, slab)
    jax.block_until_ready((gated_out2, gate_weights2))
    ref_out2, ref_gate2 = moe_reference(x2, params)
    assert jnp.allclose(gated_out2, ref_out2, atol=1e-5, rtol=1e-5)
    assert jnp.allclose(gate_weights2, ref_gate2, atol=1e-5, rtol=1e-5)

    print("KERNEL_OK")
</pallas_src>

<mosaic_0001>
module attributes {stable_mosaic.version = 11 : i64} {
  func.func @moe_kernel(%arg0: i32, %arg1: memref<8x2xf32, #tpu.memory_space<vmem>>, %arg2: memref<64x128xf32, #tpu.memory_space<vmem>>, %arg3: memref<8x4xf32, #tpu.memory_space<vmem>>, %arg4: memref<8x7xf32, #tpu.memory_space<vmem>>) attributes {dimension_semantics = [#tpu.dimension_semantics<parallel>], iteration_bounds = array<i64: 1>, scalar_prefetch = 0 : i64, scratch_operands = 0 : i64, tpu.core_type = #tpu.core_type<tc>, window_params = [{transform_indices = @transform_0, window_bounds = array<i64: 8, 2>}, {pipeline_mode = #tpu.pipeline_mode<synchronous>, transform_indices = @transform_1, window_bounds = array<i64: 64, 128>}, {transform_indices = @transform_2, window_bounds = array<i64: 8, 4>}, {transform_indices = @transform_3, window_bounds = array<i64: 8, 7>}]} {
    %c0 = arith.constant 0 : index
    %c0_0 = arith.constant 0 : index
    %0 = vector.load %arg1[%c0, %c0_0] : memref<8x2xf32, #tpu.memory_space<vmem>>, vector<8x2xf32>
    %c2 = arith.constant 2 : index
    %c0_1 = arith.constant 0 : index
    %1 = vector.load %arg2[%c2, %c0_1] : memref<64x128xf32, #tpu.memory_space<vmem>>, vector<1x40xf32>
    %2 = vector.shape_cast %1 : vector<1x40xf32> to vector<1x40xf32>
    %3 = vector.broadcast %2 : vector<1x40xf32> to vector<8x40xf32>
    %4 = vector.extract_strided_slice %0 {offsets = [0, 0], sizes = [8, 1], strides = [1, 1]} : vector<8x2xf32> to vector<8x1xf32>
    %c0_2 = arith.constant 0 : index
    %c0_3 = arith.constant 0 : index
    %5 = vector.load %arg2[%c0_2, %c0_3] : memref<64x128xf32, #tpu.memory_space<vmem>>, vector<1x40xf32>
    %6 = vector.broadcast %4 : vector<8x1xf32> to vector<8x40xf32>
    %7 = vector.broadcast %5 : vector<1x40xf32> to vector<8x40xf32>
    %8 = arith.mulf %6, %7 : vector<8x40xf32>
    %9 = arith.addf %3, %8 : vector<8x40xf32>
    %10 = vector.extract_strided_slice %0 {offsets = [0, 1], sizes = [8, 1], strides = [1, 1]} : vector<8x2xf32> to vector<8x1xf32>
    %c1 = arith.constant 1 : index
    %c0_4 = arith.constant 0 : index
    %11 = vector.load %arg2[%c1, %c0_4] : memref<64x128xf32, #tpu.memory_space<vmem>>, vector<1x40xf32>
    %12 = vector.broadcast %10 : vector<8x1xf32> to vector<8x40xf32>
    %13 = vector.broadcast %11 : vector<1x40xf32> to vector<8x40xf32>
    %14 = arith.mulf %12, %13 : vector<8x40xf32>
    %15 = arith.addf %9, %14 : vector<8x40xf32>
    %16 = math.tanh %15 : vector<8x40xf32>
    %17 = vector.extract_strided_slice %16 {offsets = [0, 0], sizes = [8, 5], strides = [1, 1]} : vector<8x40xf32> to vector<8x5xf32>
    %18 = vector.extract_strided_slice %16 {offsets = [0, 5], sizes = [8, 35], strides = [1, 1]} : vector<8x40xf32> to vector<8x35xf32>
    %c8 = arith.constant 8 : index
    %c0_5 = arith.constant 0 : index
    %19 = vector.load %arg2[%c8, %c0_5] : memref<64x128xf32, #tpu.memory_space<vmem>>, vector<1x7xf32>
    %20 = vector.shape_cast %19 : vector<1x7xf32> to vector<1x7xf32>
    %21 = vector.broadcast %20 : vector<1x7xf32> to vector<8x7xf32>
    %22 = vector.extract_strided_slice %17 {offsets = [0, 0], sizes = [8, 1], strides = [1, 1]} : vector<8x5xf32> to vector<8x1xf32>
    %c3 = arith.constant 3 : index
    %c0_6 = arith.constant 0 : index
    %23 = vector.load %arg2[%c3, %c0_6] : memref<64x128xf32, #tpu.memory_space<vmem>>, vector<1x7xf32>
    %24 = vector.broadcast %22 : vector<8x1xf32> to vector<8x7xf32>
    %25 = vector.broadcast %23 : vector<1x7xf32> to vector<8x7xf32>
    %26 = arith.mulf %24, %25 : vector<8x7xf32>
    %27 = arith.addf %21, %26 : vector<8x7xf32>
    %28 = vector.extract_strided_slice %17 {offsets = [0, 1], sizes = [8, 1], strides = [1, 1]} : vector<8x5xf32> to vector<8x1xf32>
    %c4 = arith.constant 4 : index
    %c0_7 = arith.constant 0 : index
    %29 = vector.load %arg2[%c4, %c0_7] : memref<64x128xf32, #tpu.memory_space<vmem>>, vector<1x7xf32>
    %30 = vector.broadcast %28 : vector<8x1xf32> to vector<8x7xf32>
    %31 = vector.broadcast %29 : vector<1x7xf32> to vector<8x7xf32>
    %32 = arith.mulf %30, %31 : vector<8x7xf32>
    %33 = arith.addf %27, %32 : vector<8x7xf32>
    %34 = vector.extract_strided_slice %17 {offsets = [0, 2], sizes = [8, 1], strides = [1, 1]} : vector<8x5xf32> to vector<8x1xf32>
    %c5 = arith.constant 5 : index
    %c0_8 = arith.constant 0 : index
    %35 = vector.load %arg2[%c5, %c0_8] : memref<64x128xf32, #tpu.memory_space<vmem>>, vector<1x7xf32>
    %36 = vector.broadcast %34 : vector<8x1xf32> to vector<8x7xf32>
    %37 = vector.broadcast %35 : vector<1x7xf32> to vector<8x7xf32>
    %38 = arith.mulf %36, %37 : vector<8x7xf32>
    %39 = arith.addf %33, %38 : vector<8x7xf32>
    %40 = vector.extract_strided_slice %17 {offsets = [0, 3], sizes = [8, 1], strides = [1, 1]} : vector<8x5xf32> to vector<8x1xf32>
    %c6 = arith.constant 6 : index
    %c0_9 = arith.constant 0 : index
    %41 = vector.load %arg2[%c6, %c0_9] : memref<64x128xf32, #tpu.memory_space<vmem>>, vector<1x7xf32>
    %42 = vector.broadcast %40 : vector<8x1xf32> to vector<8x7xf32>
    %43 = vector.broadcast %41 : vector<1x7xf32> to vector<8x7xf32>
    %44 = arith.mulf %42, %43 : vector<8x7xf32>
    %45 = arith.addf %39, %44 : vector<8x7xf32>
    %46 = vector.extract_strided_slice %17 {offsets = [0, 4], sizes = [8, 1], strides = [1, 1]} : vector<8x5xf32> to vector<8x1xf32>
    %c7 = arith.constant 7 : index
    %c0_10 = arith.constant 0 : index
    %47 = vector.load %arg2[%c7, %c0_10] : memref<64x128xf32, #tpu.memory_space<vmem>>, vector<1x7xf32>
    %48 = vector.broadcast %46 : vector<8x1xf32> to vector<8x7xf32>
    %49 = vector.broadcast %47 : vector<1x7xf32> to vector<8x7xf32>
    %50 = arith.mulf %48, %49 : vector<8x7xf32>
    %51 = arith.addf %45, %50 : vector<8x7xf32>
    %cst = arith.constant dense<0xFF800000> : vector<8xf32>
    %52 = vector.multi_reduction <maximumf>, %51, %cst [1] : vector<8x7xf32> to vector<8xf32>
    %53 = vector.shape_cast %52 : vector<8xf32> to vector<8x1xf32>
    %54 = vector.broadcast %53 : vector<8x1xf32> to vector<8x7xf32>
    %55 = arith.subf %51, %54 : vector<8x7xf32>
    %56 = math.exp %55 : vector<8x7xf32>
    %cst_11 = arith.constant dense<0.000000e+00> : vector<8xf32>
    %57 = vector.multi_reduction <add>, %56, %cst_11 [1] : vector<8x7xf32> to vector<8xf32>
    %58 = vector.shape_cast %57 : vector<8xf32> to vector<8x1xf32>
    %59 = tpu.reciprocal %58 : vector<8x1xf32> -> vector<8x1xf32>
    %60 = vector.broadcast %59 : vector<8x1xf32> to vector<8x7xf32>
    %61 = arith.mulf %56, %60 : vector<8x7xf32>
    %62 = tpu.concatenate %61, %61, %61, %61, %61 in 1 : vector<8x7xf32>, vector<8x7xf32>, vector<8x7xf32>, vector<8x7xf32>, vector<8x7xf32> -> vector<8x35xf32>
    %63 = arith.mulf %18, %62 : vector<8x35xf32>
    %64 = tpu.concatenate %63, %61 in 1 : vector<8x35xf32>, vector<8x7xf32> -> vector<8x42xf32>
    %c16 = arith.constant 16 : index
    %c0_12 = arith.constant 0 : index
    %65 = vector.load %arg2[%c16, %c0_12] : memref<64x128xf32, #tpu.memory_space<vmem>>, vector<42x4xf32>
    %cst_13 = arith.constant dense<0.000000e+00> : vector<8x4xf32>
    %66 = tpu.matmul %64, %65, %cst_13 {dimension_numbers = #tpu.dot_dimension_numbers<[1], [0], [0], [1], [0, 0, 1, 1], [], []>} : vector<8x42xf32>, vector<42x4xf32>, vector<8x4xf32> -> vector<8x4xf32>
    %c0_14 = arith.constant 0 : index
    %c0_15 = arith.constant 0 : index
    %67 = vector.load %arg3[%c0_14, %c0_15] : memref<8x4xf32, #tpu.memory_space<vmem>>, vector<8x4xf32>
    tpu.vector_store %arg3[%c0_14, %c0_15], %66 {strides = array<i32>} : memref<8x4xf32, #tpu.memory_space<vmem>>, vector<8x4xf32>,
    %c0_16 = arith.constant 0 : index
    %c0_17 = arith.constant 0 : index
    %68 = vector.load %arg4[%c0_16, %c0_17] : memref<8x7xf32, #tpu.memory_space<vmem>>, vector<8x7xf32>
    tpu.vector_store %arg4[%c0_16, %c0_17], %61 {strides = array<i32>} : memref<8x7xf32, #tpu.memory_space<vmem>>, vector<8x7xf32>,
    return
  }
  func.func @transform_0(%arg0: i32) -> (i32, i32) {
    %c0_i32 = arith.constant 0 : i32
    %c0_i32_0 = arith.constant 0 : i32
    return %arg0, %c0_i32 : i32, i32
  }
  func.func @transform_1(%arg0: i32) -> (i32, i32) {
    %c0_i32 = arith.constant 0 : i32
    %c0_i32_0 = arith.constant 0 : i32
    %c0_i32_1 = arith.constant 0 : i32
    return %c0_i32, %c0_i32_0 : i32, i32
  }
  func.func @transform_2(%arg0: i32) -> (i32, i32) {
    %c0_i32 = arith.constant 0 : i32
    %c0_i32_0 = arith.constant 0 : i32
    return %arg0, %c0_i32 : i32, i32
  }
  func.func @transform_3(%arg0: i32) -> (i32, i32) {
    %c0_i32 = arith.constant 0 : i32
    %c0_i32_0 = arith.constant 0 : i32
    return %arg0, %c0_i32 : i32, i32
  }
}

</mosaic_0001>

<llo_original>
// kernel: tpu_custom_call.1
$region0: #{tpu_custom_call.1}
  #allocation0 [shape = 'u32[]', space=smem, size = 0x4, offset = 0x4, fixed_abs, tag = 'smem constant byte address 0x4 - core index']
  #allocation1 [shape = 'u32[72,128]{1,0:T(1,128)}', space=vmem, size = 0x9000, scoped, tag = 'internal scratch']
  %s0 = inlined_call_operand.vmem [shape: f32[8,2], index: 0, kind: input, shape index: {}]
  %s1 = inlined_call_operand.hbm [shape: f32[64,128], index: 1, kind: input, shape index: {}]
  %s2 = inlined_call_operand.vmem [shape: f32[8,4], index: 2, kind: output, shape index: {0}]
  %s3 = inlined_call_operand.hbm [shape: f32[8,7], index: 3, kind: output, shape index: {1}]
  %4 = xla_tuple %s2, %s3
  %s5 = sld [smem:[#allocation0]]
  $region30: #{tpu_custom_call.1} parent=0
    _
  %s7 = ssub.s32 1, %s5
  %s8 = scalar_select 0, %s7, %s5
  $region1: #{tpu_custom_call.1} parent=0
    #allocation2 [shape = 'u8[32768]{0}', space=vmem, size = 0x8000, scoped, tag = 'input window, operand 1, single buffered']
    #allocation3 [shape = 's32[1]{0}', space=sflag, size = 0x4, scoped, tag = 'scoped memory for tpu_custom_call.1']
    #allocation4 [shape = 's32[1]{0}', space=sflag, size = 0x4, scoped, tag = 'scoped memory for tpu_custom_call.1']
    #allocation5 [shape = 'u8[4096]{0}', space=vmem, size = 0x1000, scoped, tag = 'output window, operand 1, single buffered']
    %9 = vsyncpa [#allocation3], 0
    %10 = vsyncpa [#allocation4], 0
    // Predicated region
    $region2: #{tpu_custom_call.1} parent=1 // pred_check
      _
    $region3: #{tpu_custom_call.1} parent=1 // pred_check_branch
      %12 = sbr.rel (0) target = $region5
    $region4: #{tpu_custom_call.1} parent=1 // pred_region
      _
    $region5: #{tpu_custom_call.1} parent=1 // pred_fallthru
      _
    // Predicated region
    $region6: #{tpu_custom_call.1} parent=1 // pred_check
      _
    $region7: #{tpu_custom_call.1} parent=1 // pred_check_branch
      %14 = sbr.rel (0) target = $region9
    $region8: #{tpu_custom_call.1} parent=1 // pred_region
      %16 = vsyncadd [#allocation3], 0
      %s17 = sshll.u32 %s1, 4
      %s18 = int_to_ptr.hbm [resolvable:$true] %s17
      %s19 = sshll.u32 [#allocation2], 4
      %s20 = int_to_ptr.vmem [resolvable:$true] %s19
      %25 = dma.hbm_to_vmem [thread:$0]  %s18, 1024, %s20, [#allocation3], 128, 128, 8
    $region9: #{tpu_custom_call.1} parent=1 // pred_fallthru
      _
    // Predicated region
    $region10: #{tpu_custom_call.1} parent=1 // pred_check
      _
    $region11: #{tpu_custom_call.1} parent=1 // pred_check_branch
      %27 = sbr.rel (0) target = $region13
    $region12: #{tpu_custom_call.1} parent=1 // pred_region
      %29 = dma.done [#allocation3], 1024
    $region13: #{tpu_custom_call.1} parent=1 // pred_fallthru
      _
    %v30 = vld [vmem:[%s0] sm:$0xff]
    %v31 = vld [vmem:[#allocation2 + $0x2] sm:$0x1]
    %v32 = vperm.slane %v31, 0
    %v33 = vld [vmem:[#allocation2] sm:$0x1]
    %35 = vset.pattern.permute.xlu0 0
    %36 = vperm.xlu0 %35, %v30
    %v37 = vpop.permute.xlu0 %36
    %v39 = vperm.slane %v33, 0
    %v40 = vmul.f32 %v37, %v39
    %v41 = vadd.f32 %v32, %v40
    %v42 = vld [vmem:[#allocation2 + $0x1] sm:$0x1]
    %43 = vset.pattern.permute.xlu0 1
    %44 = vperm.xlu0 %43, %v30
    %v45 = vpop.permute.xlu0 %44
    %v47 = vperm.slane %v42, 0
    %v48 = vmul.f32 %v45, %v47
    %v49 = vadd.f32 %v41, %v48
    %v50 = vtanh.pop %v49
    %v51 = vld [vmem:[#allocation2 + $0x8] sm:$0x1]
    %v52 = vperm.slane %v51, 0
    %v53 = vld [vmem:[#allocation2 + $0x3] sm:$0x1]
    %55 = vset.pattern.permute.xlu0 0
    %56 = vperm.xlu0 %55, %v50
    %v57 = vpop.permute.xlu0 %56
    %v59 = vperm.slane %v53, 0
    %v60 = vmul.f32 %v57, %v59
    %v61 = vadd.f32 %v52, %v60
    %v62 = vld [vmem:[#allocation2 + $0x4] sm:$0x1]
    %63 = vset.pattern.permute.xlu0 1
    %64 = vperm.xlu0 %63, %v50
    %v65 = vpop.permute.xlu0 %64
    %v67 = vperm.slane %v62, 0
    %v68 = vmul.f32 %v65, %v67
    %v69 = vadd.f32 %v61, %v68
    %v70 = vld [vmem:[#allocation2 + $0x5] sm:$0x1]
    %71 = vset.pattern.permute.xlu0 2
    %72 = vperm.xlu0 %71, %v50
    %v73 = vpop.permute.xlu0 %72
    %v75 = vperm.slane %v70, 0
    %v76 = vmul.f32 %v73, %v75
    %v77 = vadd.f32 %v69, %v76
    %v78 = vld [vmem:[#allocation2 + $0x6] sm:$0x1]
    %79 = vset.pattern.permute.xlu0 3
    %80 = vperm.xlu0 %79, %v50
    %v81 = vpop.permute.xlu0 %80
    %v83 = vperm.slane %v78, 0
    %v84 = vmul.f32 %v81, %v83
    %v85 = vadd.f32 %v77, %v84
    %v86 = vld [vmem:[#allocation2 + $0x7] sm:$0x1]
    %87 = vset.pattern.permute.xlu0 4
    %88 = vperm.xlu0 %87, %v50
    %v89 = vpop.permute.xlu0 %88
    %v91 = vperm.slane %v86, 0
    %v92 = vmul.f32 %v89, %v91
    %v93 = vadd.f32 %v85, %v92
    %vm94 = vcmask 56320
    %v95 = vsel %vm94, %v93, -inf
    %96 = vmax.xlane.f32.xlu0 %v95
    %v97 = vpop.xlane.xlu0 %96
    %v98 = vsub.f32 %v93, %v97
    %v99 = vmul.f32 %v98, 1.442695
    %v100 = vpow.pop %v99
    %v101 = vsel %vm94, %v100, 0.0
    %102 = vadd.xlane.f32.xlu0 %v101
    %v103 = vpop.xlane.xlu0 %102
    %v104 = vrcp.pop %v103
    %v105 = vmul.f32 %v103, %v104
    %v106 = vsub.f32 1.0, %v105
    %v107 = vmul.f32 %v104, %v106
    %v108 = vadd.f32 %v104, %v107
    %vm109 = vweird.f32 %v103
    %vm110 = vweird.f32 %v104
    %vm111 = vmor %vm109, %vm110
    %v112 = vsel %vm111, %v104, %v108
    %v113 = vand.u32 2147483647, %v103
    %vm114 = vcmp.eq.f32.partialorder %v113, 8.507059e+37
    %v115 = vand.u32 %v103, 2147483648
    %v116 = vor.u32 1.1754944e-38, %v115
    %v117 = vsel %vm114, %v116, %v112
    %v118 = vmul.f32 %v100, %v117
    %120 = vrot.lane.b32.xlu0 %v118, 7
    %v121 = vpop.permute.xlu0 %120
    %123 = vrot.lane.b32.xlu0 %v118, 14
    %v124 = vpop.permute.xlu0 %123
    %126 = vrot.lane.b32.xlu0 %v118, 21
    %v127 = vpop.permute.xlu0 %126
    %129 = vrot.lane.b32.xlu0 %v118, 28
    %v130 = vpop.permute.xlu0 %129
    %v132 = vsel %vm94, %v118, %v121
    %vm133 = vcmask 113664
    %v134 = vsel %vm133, %v132, %v124
    %vm135 = vcmask 171008
    %v136 = vsel %vm135, %v134, %v127
    %vm137 = vcmask 228352
    %v138 = vsel %vm137, %v136, %v130
    %140 = vrot.lane.b32.xlu0 %v138, 5
    %v141 = vpop.permute.xlu0 %140
    %v143 = vmul.f32 %v50, %v141
    %145 = vrot.lane.b32.xlu0 %v143, 123
    %v146 = vpop.permute.xlu0 %145
    %148 = vrot.lane.b32.xlu0 %v118, 35
    %v149 = vpop.permute.xlu0 %148
    %vm151 = vcmask 285696
    %v152 = vsel %vm151, %v146, %v149
    %v153 = vld [vmem:[#allocation2 + $0x10] sm:$0xff]
    %v154 = vld [vmem:[#allocation2 + $0x18] sm:$0xff]
    %v155 = vld [vmem:[#allocation2 + $0x20] sm:$0xff]
    %v156 = vld [vmem:[#allocation2 + $0x28] sm:$0xff]
    %v157 = vld [vmem:[#allocation2 + $0x30] sm:$0xff]
    %v158 = vld [vmem:[#allocation2 + $0x38] sm:$0x3]
    %vm159 = vcmask 343040
    %v161 = vsel %vm159, %v152, 0
    %vm163 = vcmask 1041408
    %v165 = vsel %vm163, %v158, 0
    %167 = vmatpush.msra.mxu0 0.0
    %168 = vmatpush.msra.mxu0 0.0
    %169 = vmatpush.msra.mxu0 0.0
    %170 = vmatpush.msra.mxu0 0.0
    %171 = vmatpush.msra.mxu0 0.0
    %172 = vmatpush.msra.mxu0 0.0
    %173 = vmatpush.msra.mxu0 0.0
    %174 = vmatpush.msra.mxu0 0.0
    %175 = vmatpush.msra.mxu0 0.0
    %176 = vmatpush.msra.mxu0 0.0
    %177 = vmatpush.msra.mxu0 %v165
    %178 = vmatpush.msra.mxu0 %v157
    %179 = vmatpush.msra.mxu0 %v156
    %180 = vmatpush.msra.mxu0 %v155
    %181 = vmatpush.msra.mxu0 %v154
    %182 = vmatpush.msra.mxu0 %v153
    %183 = vmatmul.f32.gmra.mxu0 %v161
    %v184 = vpop.f32.mrf.mxu0
    %v185 = vadd.f32 0.0, %v184
    %186 = vdwg.mxu0
    %vm187 = vcmask 31744
    %188 = vst.msk [vmem:[%s2] sm:$0xff] %vm187, %v185
    %189 = vst.msk [vmem:[#allocation5] sm:$0xff] %vm94, %v118
    // Predicated region
    $region14: #{tpu_custom_call.1} parent=1 // pred_check
      _
    $region15: #{tpu_custom_call.1} parent=1 // pred_check_branch
      %191 = sbr.rel (0) target = $region17
    $region16: #{tpu_custom_call.1} parent=1 // pred_region
      _
    $region17: #{tpu_custom_call.1} parent=1 // pred_fallthru
      _
    // Predicated region
    $region18: #{tpu_custom_call.1} parent=1 // pred_check
      _
    $region19: #{tpu_custom_call.1} parent=1 // pred_check_branch
      %193 = sbr.rel (0) target = $region21
    $region20: #{tpu_custom_call.1} parent=1 // pred_region
      %195 = vsyncadd [#allocation4], 0
      %s197 = sshll.u32 [#allocation5], 4
      %s198 = int_to_ptr.vmem [resolvable:$true] %s197
      %s199 = sshll.u32 %s3, 4
      %s200 = int_to_ptr.hbm [resolvable:$true] %s199
      %202 = dma.vmem_to_hbm [thread:$0]  %s198, 128, %s200, [#allocation4]
    $region21: #{tpu_custom_call.1} parent=1 // pred_fallthru
      _
    // Predicated region
    $region22: #{tpu_custom_call.1} parent=1 // pred_check
      _
    $region23: #{tpu_custom_call.1} parent=1 // pred_check_branch
      %204 = sbr.rel (0) target = $region25
    $region24: #{tpu_custom_call.1} parent=1 // pred_region
      _
    $region25: #{tpu_custom_call.1} parent=1 // pred_fallthru
      _
    // Predicated region
    $region26: #{tpu_custom_call.1} parent=1 // pred_check
      _
    $region27: #{tpu_custom_call.1} parent=1 // pred_check_branch
      %206 = sbr.rel (0) target = $region29
    $region28: #{tpu_custom_call.1} parent=1 // pred_region
      %208 = dma.done [#allocation4], 128
    $region29: #{tpu_custom_call.1} parent=1 // pred_fallthru
      _
    %209 = vsyncpa [#allocation3], 1
    %210 = vsyncpa [#allocation4], 1

</llo_original>
